<compile_context>
chip_gen: v5e
topology: v5e:2x2
jax: 0.10.0
libtpu: 0.0.40
codegen_flags: <defaults>
</compile_context>

<pallas_src>
import functools

import jax
import jax.numpy as jnp
from jax import lax
from jax.experimental import pallas as pl
from jax.experimental.pallas import tpu as pltpu


def _conv_bn_relu_kernel(x_ref, w_ref, shift_ref, o_ref, patch_ref, *,
                         tile_h, w_out, kh_sz, kw_sz, stride, dilation,
                         use_relu):
    """One grid step = one batch image x one block of `tile_h` output rows.

    x_ref     : (1, Hp, Wp, C_in)        zero-padded NHWC image (bf16, VMEM,
                                         resident across the row-block axis)
    w_ref     : (KH*KW*C_in, C_out_pad)  scale-folded weights (bf16, VMEM)
    shift_ref : (1, C_out_pad)           folded BN shift (f32, VMEM)
    o_ref     : (1, tile_m, C_out_pad)   lane-dense output slab (f32, VMEM)
    patch_ref : (tile_h, w_out, KH*KW*C_in) bf16 VMEM scratch (im2col slab)
    """
    c_in = x_ref.shape[-1]
    k_fold = kh_sz * kw_sz * c_in
    row_step = tile_h * stride
    win_h = (tile_h - 1) * stride + dilation * (kh_sz - 1) + 1
    w_span = (w_out - 1) * stride + 1

    r = pl.program_id(1)
    row0 = pl.multiple_of(r * row_step, row_step)
    # Halo'd input row window for this output row block (dynamic ref slice,
    # no full-image vreg load).
    xwin = x_ref[0, pl.ds(row0, win_h), :, :]          # (win_h, Wp, C_in)

    # im2col: scatter each tap window into the fused contraction axis.
    for kh in range(kh_sz):
        for kw in range(kw_sz):
            tap = lax.slice(
                xwin,
                (kh * dilation, kw * dilation, 0),
                (kh * dilation + (tile_h - 1) * stride + 1,
                 kw * dilation + w_span,
                 c_in),
                (stride, stride, 1))                   # (tile_h, w_out, C_in)
            t = kh * kw_sz + kw
            patch_ref[:, :, t * c_in:(t + 1) * c_in] = tap

    patch = patch_ref[...].reshape(tile_h * w_out, k_fold)   # (tile_m, K)
    acc = jnp.dot(patch, w_ref[...],
                  preferred_element_type=jnp.float32)        # (tile_m, C_out_pad)

    y = acc + shift_ref[...]                                 # BN shift (scale pre-folded)
    if use_relu:
        y = jnp.maximum(y, 0.0)
    o_ref[0] = y.astype(o_ref.dtype)                         # full-lane store


def _pick_tile_h(h_out, w_out):
    """Largest divisor of h_out with tile_m = tile_h*w_out <= 512, keeping
    >= 2 row blocks when possible (pipelining depth / megacore)."""
    max_t = max(1, min(h_out, 512 // max(w_out, 1)))
    if h_out >= 2:
        max_t = min(max_t, max(1, h_out // 2))
    tile_h = 1
    for t in range(1, max_t + 1):
        if h_out % t == 0:
            tile_h = t
    return tile_h


def conv_bn_relu(x_nchw, weight_oihw, gamma, beta, running_mean, running_var,
                 *, stride=1, padding=1, dilation=1, eps=1e-5, use_relu=True):
    """Forward pass of ConvBNReLU (eval-mode BN). Returns NCHW f32 output."""
    n, c_in, h, w = x_nchw.shape
    c_out, c_in_w, kh_sz, kw_sz = weight_oihw.shape
    assert c_in == c_in_w

    h_out = (h + 2 * padding - dilation * (kh_sz - 1) - 1) // stride + 1
    w_out = (w + 2 * padding - dilation * (kw_sz - 1) - 1) // stride + 1

    # ---- BN (eval) folded: y = conv(x, W * scale) + shift ----
    scale = (gamma / jnp.sqrt(running_var + eps)).astype(jnp.float32)
    shift = (beta - running_mean * scale).astype(jnp.float32)

    k_fold = kh_sz * kw_sz * c_in
    c_out_pad = max(128, -(-c_out // 128) * 128)      # lane-dense output width

    w_hwio = jnp.transpose(weight_oihw, (2, 3, 1, 0)).astype(jnp.float32)
    w_hwio = w_hwio * scale[None, None, None, :]
    w2d = w_hwio.reshape(k_fold, c_out).astype(jnp.bfloat16)
    w2d = jnp.pad(w2d, ((0, 0), (0, c_out_pad - c_out)))
    shift2d = jnp.pad(shift, (0, c_out_pad - c_out)).reshape(1, c_out_pad)

    # NHWC + bf16 + spatial zero-pad.
    x_nhwc = jnp.transpose(x_nchw, (0, 2, 3, 1)).astype(jnp.bfloat16)
    x_pad = jnp.pad(
        x_nhwc, ((0, 0), (padding, padding), (padding, padding), (0, 0)))
    hp, wp = h + 2 * padding, w + 2 * padding

    tile_h = _pick_tile_h(h_out, w_out)
    n_rb = h_out // tile_h
    tile_m = tile_h * w_out

    kernel = functools.partial(
        _conv_bn_relu_kernel,
        tile_h=tile_h, w_out=w_out, kh_sz=kh_sz, kw_sz=kw_sz,
        stride=stride, dilation=dilation, use_relu=use_relu)

    out_flat = pl.pallas_call(
        kernel,
        out_shape=jax.ShapeDtypeStruct((n, h_out * w_out, c_out_pad),
                                       jnp.float32),
        grid_spec=pltpu.PrefetchScalarGridSpec(
            num_scalar_prefetch=0,
            grid=(n, n_rb),
            in_specs=[
                # Padded image, resident across the row-block axis.
                pl.BlockSpec((1, hp, wp, c_in), lambda b, r: (b, 0, 0, 0)),
                pl.BlockSpec((k_fold, c_out_pad), lambda b, r: (0, 0)),
                pl.BlockSpec((1, c_out_pad), lambda b, r: (0, 0)),
            ],
            out_specs=pl.BlockSpec((1, tile_m, c_out_pad),
                                   lambda b, r: (b, r, 0)),
            scratch_shapes=[
                pltpu.VMEM((tile_h, w_out, k_fold), jnp.bfloat16),
            ]),
        compiler_params=pltpu.CompilerParams(
            dimension_semantics=("parallel", "parallel")),
    )(x_pad, w2d, shift2d)

    out = out_flat[:, :, :c_out].reshape(n, h_out, w_out, c_out)
    return jnp.transpose(out, (0, 3, 1, 2))   # back to NCHW


def _reference(x_nchw, weight_oihw, gamma, beta, running_mean, running_var,
               *, stride, padding, dilation, eps, use_relu):
    """lax.conv reference using the same bf16-quantized inputs / folded weights
    as the kernel (so only the conv/tiling logic is being compared; f32 acc)."""
    scale = gamma / jnp.sqrt(running_var + eps)
    shift = beta - running_mean * scale
    w = weight_oihw.astype(jnp.float32) * scale[:, None, None, None]
    w = w.astype(jnp.bfloat16).astype(jnp.float32)
    x = x_nchw.astype(jnp.bfloat16).astype(jnp.float32)
    y = lax.conv_general_dilated(
        x, w,
        window_strides=(stride, stride),
        padding=((padding, padding), (padding, padding)),
        rhs_dilation=(dilation, dilation),
        dimension_numbers=("NCHW", "OIHW", "NCHW"))
    y = y + shift[None, :, None, None]
    if use_relu:
        y = jnp.maximum(y, 0.0)
    return y


if __name__ == "__main__":
    # ConvBNReLU(c_in=4, c_out=8, kernel_size=3, stride=1, padding=1, dilation=1)
    N, C_IN, H, W = 2, 4, 16, 16
    C_OUT, K = 8, 3
    STRIDE, PAD, DIL = 1, 1, 1

    key = jax.random.PRNGKey(0)
    kx, kw, kg, kb, km, kv = jax.random.split(key, 6)

    x = jax.random.normal(kx, (N, C_IN, H, W), jnp.float32)
    weight = jax.random.normal(kw, (C_OUT, C_IN, K, K), jnp.float32) * 0.1
    gamma = jax.random.uniform(kg, (C_OUT,), jnp.float32, 0.5, 1.5)
    beta = jax.random.normal(kb, (C_OUT,), jnp.float32) * 0.1
    running_mean = jax.random.normal(km, (C_OUT,), jnp.float32) * 0.1
    running_var = jax.random.uniform(kv, (C_OUT,), jnp.float32, 0.5, 1.5)

    out = conv_bn_relu(x, weight, gamma, beta, running_mean, running_var,
                       stride=STRIDE, padding=PAD, dilation=DIL,
                       use_relu=True)
    out = jax.block_until_ready(out)

    ref = _reference(x, weight, gamma, beta, running_mean, running_var,
                     stride=STRIDE, padding=PAD, dilation=DIL, eps=1e-5,
                     use_relu=True)
    assert out.shape == (N, C_OUT, H, W)
    assert jnp.allclose(out, ref, atol=1e-3, rtol=1e-3), "mismatch vs reference"
    print("KERNEL_OK")
</pallas_src>

<mosaic_0001>
module attributes {stable_mosaic.version = 11 : i64} {
  func.func @_conv_bn_relu_kernel(%arg0: i32, %arg1: i32, %arg2: memref<1x18x18x4xbf16, #tpu.memory_space<vmem>>, %arg3: memref<36x128xbf16, #tpu.memory_space<vmem>>, %arg4: memref<1x128xf32, #tpu.memory_space<vmem>>, %arg5: memref<1x128x128xf32, #tpu.memory_space<vmem>>, %arg6: memref<8x16x36xbf16, #tpu.memory_space<vmem>>) attributes {dimension_semantics = [#tpu.dimension_semantics<parallel>, #tpu.dimension_semantics<parallel>], iteration_bounds = array<i64: 2, 2>, scalar_prefetch = 0 : i64, scratch_operands = 1 : i64, tpu.core_type = #tpu.core_type<tc>, window_params = [{transform_indices = @transform_0, window_bounds = array<i64: 1, 18, 18, 4>}, {pipeline_mode = #tpu.pipeline_mode<synchronous>, transform_indices = @transform_1, window_bounds = array<i64: 36, 128>}, {pipeline_mode = #tpu.pipeline_mode<synchronous>, transform_indices = @transform_2, window_bounds = array<i64: 1, 128>}, {transform_indices = @transform_3, window_bounds = array<i64: 1, 128, 128>}]} {
    %c8_i32 = arith.constant 8 : i32
    %0 = arith.muli %arg1, %c8_i32 : i32
    %1 = tpu.assume_multiple %0, 8 : i32
    %c0 = arith.constant 0 : index
    %2 = arith.index_cast %1 : i32 to index
    %c0_0 = arith.constant 0 : index
    %c0_1 = arith.constant 0 : index
    %3 = vector.load %arg2[%c0, %2, %c0_0, %c0_1] : memref<1x18x18x4xbf16, #tpu.memory_space<vmem>>, vector<1x10x18x4xbf16>
    %4 = vector.shape_cast %3 : vector<1x10x18x4xbf16> to vector<10x18x4xbf16>
    %5 = vector.extract_strided_slice %4 {offsets = [0, 0, 0], sizes = [8, 16, 4], strides = [1, 1, 1]} : vector<10x18x4xbf16> to vector<8x16x4xbf16>
    %c0_2 = arith.constant 0 : index
    %c0_3 = arith.constant 0 : index
    %c0_4 = arith.constant 0 : index
    %6 = vector.load %arg6[%c0_2, %c0_3, %c0_4] : memref<8x16x36xbf16, #tpu.memory_space<vmem>>, vector<8x16x4xbf16>
    tpu.vector_store %arg6[%c0_2, %c0_3, %c0_4], %5 {strides = array<i32>} : memref<8x16x36xbf16, #tpu.memory_space<vmem>>, vector<8x16x4xbf16>,
    %7 = vector.extract_strided_slice %4 {offsets = [0, 1, 0], sizes = [8, 16, 4], strides = [1, 1, 1]} : vector<10x18x4xbf16> to vector<8x16x4xbf16>
    %c0_5 = arith.constant 0 : index
    %c0_6 = arith.constant 0 : index
    %c4 = arith.constant 4 : index
    %8 = vector.load %arg6[%c0_5, %c0_6, %c4] : memref<8x16x36xbf16, #tpu.memory_space<vmem>>, vector<8x16x4xbf16>
    tpu.vector_store %arg6[%c0_5, %c0_6, %c4], %7 {strides = array<i32>} : memref<8x16x36xbf16, #tpu.memory_space<vmem>>, vector<8x16x4xbf16>,
    %9 = vector.extract_strided_slice %4 {offsets = [0, 2, 0], sizes = [8, 16, 4], strides = [1, 1, 1]} : vector<10x18x4xbf16> to vector<8x16x4xbf16>
    %c0_7 = arith.constant 0 : index
    %c0_8 = arith.constant 0 : index
    %c8 = arith.constant 8 : index
    %10 = vector.load %arg6[%c0_7, %c0_8, %c8] : memref<8x16x36xbf16, #tpu.memory_space<vmem>>, vector<8x16x4xbf16>
    tpu.vector_store %arg6[%c0_7, %c0_8, %c8], %9 {strides = array<i32>} : memref<8x16x36xbf16, #tpu.memory_space<vmem>>, vector<8x16x4xbf16>,
    %11 = vector.extract_strided_slice %4 {offsets = [1, 0, 0], sizes = [8, 16, 4], strides = [1, 1, 1]} : vector<10x18x4xbf16> to vector<8x16x4xbf16>
    %c0_9 = arith.constant 0 : index
    %c0_10 = arith.constant 0 : index
    %c12 = arith.constant 12 : index
    %12 = vector.load %arg6[%c0_9, %c0_10, %c12] : memref<8x16x36xbf16, #tpu.memory_space<vmem>>, vector<8x16x4xbf16>
    tpu.vector_store %arg6[%c0_9, %c0_10, %c12], %11 {strides = array<i32>} : memref<8x16x36xbf16, #tpu.memory_space<vmem>>, vector<8x16x4xbf16>,
    %13 = vector.extract_strided_slice %4 {offsets = [1, 1, 0], sizes = [8, 16, 4], strides = [1, 1, 1]} : vector<10x18x4xbf16> to vector<8x16x4xbf16>
    %c0_11 = arith.constant 0 : index
    %c0_12 = arith.constant 0 : index
    %c16 = arith.constant 16 : index
    %14 = vector.load %arg6[%c0_11, %c0_12, %c16] : memref<8x16x36xbf16, #tpu.memory_space<vmem>>, vector<8x16x4xbf16>
    tpu.vector_store %arg6[%c0_11, %c0_12, %c16], %13 {strides = array<i32>} : memref<8x16x36xbf16, #tpu.memory_space<vmem>>, vector<8x16x4xbf16>,
    %15 = vector.extract_strided_slice %4 {offsets = [1, 2, 0], sizes = [8, 16, 4], strides = [1, 1, 1]} : vector<10x18x4xbf16> to vector<8x16x4xbf16>
    %c0_13 = arith.constant 0 : index
    %c0_14 = arith.constant 0 : index
    %c20 = arith.constant 20 : index
    %16 = vector.load %arg6[%c0_13, %c0_14, %c20] : memref<8x16x36xbf16, #tpu.memory_space<vmem>>, vector<8x16x4xbf16>
    tpu.vector_store %arg6[%c0_13, %c0_14, %c20], %15 {strides = array<i32>} : memref<8x16x36xbf16, #tpu.memory_space<vmem>>, vector<8x16x4xbf16>,
    %17 = vector.extract_strided_slice %4 {offsets = [2, 0, 0], sizes = [8, 16, 4], strides = [1, 1, 1]} : vector<10x18x4xbf16> to vector<8x16x4xbf16>
    %c0_15 = arith.constant 0 : index
    %c0_16 = arith.constant 0 : index
    %c24 = arith.constant 24 : index
    %18 = vector.load %arg6[%c0_15, %c0_16, %c24] : memref<8x16x36xbf16, #tpu.memory_space<vmem>>, vector<8x16x4xbf16>
    tpu.vector_store %arg6[%c0_15, %c0_16, %c24], %17 {strides = array<i32>} : memref<8x16x36xbf16, #tpu.memory_space<vmem>>, vector<8x16x4xbf16>,
    %19 = vector.extract_strided_slice %4 {offsets = [2, 1, 0], sizes = [8, 16, 4], strides = [1, 1, 1]} : vector<10x18x4xbf16> to vector<8x16x4xbf16>
    %c0_17 = arith.constant 0 : index
    %c0_18 = arith.constant 0 : index
    %c28 = arith.constant 28 : index
    %20 = vector.load %arg6[%c0_17, %c0_18, %c28] : memref<8x16x36xbf16, #tpu.memory_space<vmem>>, vector<8x16x4xbf16>
    tpu.vector_store %arg6[%c0_17, %c0_18, %c28], %19 {strides = array<i32>} : memref<8x16x36xbf16, #tpu.memory_space<vmem>>, vector<8x16x4xbf16>,
    %21 = vector.extract_strided_slice %4 {offsets = [2, 2, 0], sizes = [8, 16, 4], strides = [1, 1, 1]} : vector<10x18x4xbf16> to vector<8x16x4xbf16>
    %c0_19 = arith.constant 0 : index
    %c0_20 = arith.constant 0 : index
    %c32 = arith.constant 32 : index
    %22 = vector.load %arg6[%c0_19, %c0_20, %c32] : memref<8x16x36xbf16, #tpu.memory_space<vmem>>, vector<8x16x4xbf16>
    tpu.vector_store %arg6[%c0_19, %c0_20, %c32], %21 {strides = array<i32>} : memref<8x16x36xbf16, #tpu.memory_space<vmem>>, vector<8x16x4xbf16>,
    %c0_21 = arith.constant 0 : index
    %c0_22 = arith.constant 0 : index
    %c0_23 = arith.constant 0 : index
    %23 = vector.load %arg6[%c0_21, %c0_22, %c0_23] : memref<8x16x36xbf16, #tpu.memory_space<vmem>>, vector<8x16x36xbf16>
    %24 = vector.shape_cast %23 : vector<8x16x36xbf16> to vector<128x36xbf16>
    %c0_24 = arith.constant 0 : index
    %c0_25 = arith.constant 0 : index
    %25 = vector.load %arg3[%c0_24, %c0_25] : memref<36x128xbf16, #tpu.memory_space<vmem>>, vector<36x128xbf16>
    %cst = arith.constant dense<0.000000e+00> : vector<128x128xf32>
    %26 = tpu.matmul %24, %25, %cst {dimension_numbers = #tpu.dot_dimension_numbers<[1], [0], [0], [1], [0, 0, 1, 1], [], []>} : vector<128x36xbf16>, vector<36x128xbf16>, vector<128x128xf32> -> vector<128x128xf32>
    %c0_26 = arith.constant 0 : index
    %c0_27 = arith.constant 0 : index
    %27 = vector.load %arg4[%c0_26, %c0_27] : memref<1x128xf32, #tpu.memory_space<vmem>>, vector<1x128xf32>
    %28 = vector.broadcast %27 : vector<1x128xf32> to vector<128x128xf32>
    %29 = arith.addf %26, %28 : vector<128x128xf32>
    %cst_28 = arith.constant 0.000000e+00 : f32
    %30 = vector.broadcast %cst_28 : f32 to vector<128x128xf32>
    %31 = arith.maximumf %29, %30 : vector<128x128xf32>
    %c0_29 = arith.constant 0 : index
    %c0_30 = arith.constant 0 : index
    %c0_31 = arith.constant 0 : index
    %32 = vector.load %arg5[%c0_29, %c0_30, %c0_31] : memref<1x128x128xf32, #tpu.memory_space<vmem>>, vector<1x128x128xf32>
    %33 = vector.shape_cast %32 : vector<1x128x128xf32> to vector<128x128xf32>
    %34 = vector.shape_cast %31 : vector<128x128xf32> to vector<1x128x128xf32>
    tpu.vector_store %arg5[%c0_29, %c0_30, %c0_31], %34 {strides = array<i32>} : memref<1x128x128xf32, #tpu.memory_space<vmem>>, vector<1x128x128xf32>,
    return
  }
  func.func @transform_0(%arg0: i32, %arg1: i32) -> (i32, i32, i32, i32) {
    %c0_i32 = arith.constant 0 : i32
    %c0_i32_0 = arith.constant 0 : i32
    %c0_i32_1 = arith.constant 0 : i32
    %c0_i32_2 = arith.constant 0 : i32
    return %arg0, %c0_i32, %c0_i32_0, %c0_i32_1 : i32, i32, i32, i32
  }
  func.func @transform_1(%arg0: i32, %arg1: i32) -> (i32, i32) {
    %c0_i32 = arith.constant 0 : i32
    %c0_i32_0 = arith.constant 0 : i32
    %c0_i32_1 = arith.constant 0 : i32
    return %c0_i32, %c0_i32_0 : i32, i32
  }
  func.func @transform_2(%arg0: i32, %arg1: i32) -> (i32, i32) {
    %c0_i32 = arith.constant 0 : i32
    %c0_i32_0 = arith.constant 0 : i32
    %c0_i32_1 = arith.constant 0 : i32
    return %c0_i32, %c0_i32_0 : i32, i32
  }
  func.func @transform_3(%arg0: i32, %arg1: i32) -> (i32, i32, i32) {
    %c0_i32 = arith.constant 0 : i32
    %c0_i32_0 = arith.constant 0 : i32
    return %arg0, %arg1, %c0_i32 : i32, i32, i32
  }
}

</mosaic_0001>

<llo_original>
// kernel: tpu_custom_call.1
$region0: #{tpu_custom_call.1}
  #allocation0 [shape = 'u32[]', space=smem, size = 0x4, offset = 0x4, fixed_abs, tag = 'smem constant byte address 0x4 - core index']
  #allocation1 [shape = 'u32[72,128]{1,0:T(1,128)}', space=vmem, size = 0x9000, scoped, tag = 'internal scratch']
  #allocation2 [shape = 'bf16[8,16,36]{2,1,0:T(8,128)(2,1)}', space=vmem, size = 0x8000, scoped, tag = 'scratch operand']
  %s0 = inlined_call_operand.vmem [shape: bf16[2,18,18,4], index: 0, kind: input, shape index: {}]
  %s1 = inlined_call_operand.vmem [shape: bf16[36,128], index: 1, kind: input, shape index: {}]
  %s2 = inlined_call_operand.vmem [shape: f32[1,128], index: 2, kind: input, shape index: {}]
  %s3 = inlined_call_operand.hbm [shape: f32[2,256,128], index: 3, kind: output, shape index: {}]
  %s4 = sld [smem:[#allocation0]]
  $region45: #{tpu_custom_call.1} parent=0
    _
  %s6 = ssub.s32 1, %s4
  %s7 = scalar_select 0, %s6, %s4
  $region1: #{tpu_custom_call.1} parent=0
    #allocation3 [shape = 'u8[131072]{0}', space=vmem, size = 0x20000, scoped, tag = 'output window, operand 0']
    #allocation4 [shape = 's32[2]{0}', space=sflag, size = 0x8, scoped, tag = 'scoped memory for tpu_custom_call.1']
    %8 = vsyncpa [#allocation4], 0
    %s9 = scalar_lea.sflag [#allocation4], 1
    %10 = vsyncpa %s9, 0
    loop: start=0, step=1, limit=6
    $region2: #{tpu_custom_call.1} parent=1 // loop_pre_header
      _
    $region3: #{tpu_custom_call.1} parent=1 // loop_header
      %s12 = sphi 0, %s16
      %p13 = scmp.ge.s32.totalorder %s12, 6
      %s19 = sphi 0, %s31
      %s20 = sphi 0, %s27
      %s21 = sphi 0, %s19
      %s22 = sphi 0, %s20
      %s23 = sphi 0, %s21
      %s24 = sphi 0, %s22
      %s34 = sphi 0, %s36
      %s37 = sphi 0, %s34
      %s38 = sphi 0, %s37
      %s54 = sphi 0, %s38
      %s58 = sphi 0, %s58
      %s60 = sphi 0, %s58
      %s61 = sphi 0, %s60
      %s75 = sphi 0, %s61
      %s79 = sphi 0, %s79
      %s81 = sphi 0, %s79
      %s82 = sphi 0, %s81
      %s96 = sphi 0, %s82
      %s104 = sphi 0, %s106
      %s107 = sphi 0, %s104
      %s108 = sphi 0, %s107
      %s124 = sphi 0, %s108
    $region4: #{tpu_custom_call.1} parent=1 // loop_header_branch
      %15 = sbr.rel (%p13) target = $region8
    $region5: #{tpu_custom_call.1} parent=1 // loop_body
      %s17 = ssub.s32 %s12, 1
      %s18 = ssub.s32 %s12, 2
      %s25 = sadd.s32 1, %s20
      %p26 = scmp.ge.s32.totalorder %s25, 2
      %s27 = scalar_select %p26, 0, %s25
      %s28 = sadd.s32 1, %s19
      %s29 = scalar_select %p26, %s28, %s19
      %p30 = scmp.ge.s32.totalorder %s29, 2
      %s31 = scalar_select %p30, 0, %s29
      %s32 = ssub.s32 %s19, %s31
      %p33 = scmp.eq.s32.totalorder %s32, 0
      %s35 = sadd.s32 %s34, 1
      %s36 = scalar_select %p33, %s34, %s35
      %p39 = pneg %p33
      %p40 = scmp.eq.s32.totalorder %s12, 3
      %p41 = por %p39, %p40
      %p42 = scmp.ne.s32.totalorder %s34, %s37
      %p43 = scmp.eq.s32.totalorder %s12, 0
      %p44 = por %p42, %p43
      %p45 = scmp.ne.s32.totalorder %s34, %s37
      %p46 = scmp.eq.s32.totalorder %s17, 3
      %p47 = por %p45, %p46
      %p48 = scmp.ne.s32.totalorder %s37, %s38
      %p49 = scmp.eq.s32.totalorder %s17, 0
      %p50 = por %p48, %p49
      %p51 = scmp.ne.s32.totalorder %s37, %s38
      %p52 = scmp.eq.s32.totalorder %s18, 3
      %p53 = por %p51, %p52
      %p55 = scmp.ne.s32.totalorder %s38, %s54
      %p56 = scmp.eq.s32.totalorder %s18, 0
      %p57 = por %p55, %p56
      %s59 = sadd.s32 %s58, 1
      %p62 = scmp.eq.s32.totalorder %s12, 3
      %p63 = scmp.ne.s32.totalorder %s58, %s60
      %p64 = scmp.eq.s32.totalorder %s12, 0
      %p65 = por %p63, %p64
      %p66 = scmp.ne.s32.totalorder %s58, %s60
      %p67 = scmp.eq.s32.totalorder %s17, 3
      %p68 = por %p66, %p67
      %p69 = scmp.ne.s32.totalorder %s60, %s61
      %p70 = scmp.eq.s32.totalorder %s17, 0
      %p71 = por %p69, %p70
      %p72 = scmp.ne.s32.totalorder %s60, %s61
      %p73 = scmp.eq.s32.totalorder %s18, 3
      %p74 = por %p72, %p73
      %p76 = scmp.ne.s32.totalorder %s61, %s75
      %p77 = scmp.eq.s32.totalorder %s18, 0
      %p78 = por %p76, %p77
      %s80 = sadd.s32 %s79, 1
      %p83 = scmp.eq.s32.totalorder %s12, 3
      %p84 = scmp.ne.s32.totalorder %s79, %s81
      %p85 = scmp.eq.s32.totalorder %s12, 0
      %p86 = por %p84, %p85
      %p87 = scmp.ne.s32.totalorder %s79, %s81
      %p88 = scmp.eq.s32.totalorder %s17, 3
      %p89 = por %p87, %p88
      %p90 = scmp.ne.s32.totalorder %s81, %s82
      %p91 = scmp.eq.s32.totalorder %s17, 0
      %p92 = por %p90, %p91
      %p93 = scmp.ne.s32.totalorder %s81, %s82
      %p94 = scmp.eq.s32.totalorder %s18, 3
      %p95 = por %p93, %p94
      %p97 = scmp.ne.s32.totalorder %s82, %s96
      %p98 = scmp.eq.s32.totalorder %s18, 0
      %p99 = por %p97, %p98
      %s100 = ssub.s32 %s19, %s31
      %s101 = ssub.s32 %s20, %s27
      %s102 = sor.u32 %s100, %s101
      %p103 = scmp.eq.s32.totalorder %s102, 0
      %s105 = sadd.s32 %s104, 1
      %s106 = scalar_select %p103, %s104, %s105
      %p109 = pneg %p103
      %p110 = scmp.eq.s32.totalorder %s12, 3
      %p111 = por %p109, %p110
      %p112 = scmp.ne.s32.totalorder %s104, %s107
      %p113 = scmp.eq.s32.totalorder %s12, 0
      %p114 = por %p112, %p113
      %p115 = scmp.ne.s32.totalorder %s104, %s107
      %p116 = scmp.eq.s32.totalorder %s17, 3
      %p117 = por %p115, %p116
      %p118 = scmp.ne.s32.totalorder %s107, %s108
      %p119 = scmp.eq.s32.totalorder %s17, 0
      %p120 = por %p118, %p119
      %p121 = scmp.ne.s32.totalorder %s107, %s108
      %p122 = scmp.eq.s32.totalorder %s18, 3
      %p123 = por %p121, %p122
      %p125 = scmp.ne.s32.totalorder %s108, %s124
      %p126 = scmp.eq.s32.totalorder %s18, 0
      %p127 = por %p125, %p126
      %p128 = scmp.le.s32.totalorder 1, %s12
      %p129 = scmp.lt.s32.totalorder %s12, 5
      %p130 = pnand %p128, %p129
      %p131 = pneg %p130
      // Predicated region
      $region9: #{tpu_custom_call.1} parent=5 // pred_check
        _
      $region10: #{tpu_custom_call.1} parent=5 // pred_check_branch
        %133 = sbr.rel (%p130) target = $region12
      $region11: #{tpu_custom_call.1} parent=5 // pred_region
        %s134 = ssub.s32 %s12, 1
        // Predicated region
        $region13: #{tpu_custom_call.1} parent=11 // pred_check
          %p135 = pneg %p71
        $region14: #{tpu_custom_call.1} parent=11 // pred_check_branch
          %137 = sbr.rel (%p135) target = $region16
        $region15: #{tpu_custom_call.1} parent=11 // pred_region
          _
        $region16: #{tpu_custom_call.1} parent=11 // pred_fallthru
          _
        // Predicated region
        $region17: #{tpu_custom_call.1} parent=11 // pred_check
          %p138 = pneg %p92
        $region18: #{tpu_custom_call.1} parent=11 // pred_check_branch
          %140 = sbr.rel (%p138) target = $region20
        $region19: #{tpu_custom_call.1} parent=11 // pred_region
          _
        $region20: #{tpu_custom_call.1} parent=11 // pred_fallthru
          _
      $region12: #{tpu_custom_call.1} parent=5 // pred_fallthru
        _
      %p141 = scmp.lt.s32.totalorder %s12, 4
      // Predicated region
      $region21: #{tpu_custom_call.1} parent=5 // pred_check
        %p142 = pneg %p141
      $region22: #{tpu_custom_call.1} parent=5 // pred_check_branch
        %144 = sbr.rel (%p142) target = $region24
      $region23: #{tpu_custom_call.1} parent=5 // pred_region
        // Predicated region
        $region25: #{tpu_custom_call.1} parent=23 // pred_check
          %p145 = pneg %p44
        $region26: #{tpu_custom_call.1} parent=23 // pred_check_branch
          %147 = sbr.rel (%p145) target = $region28
        $region27: #{tpu_custom_call.1} parent=23 // pred_region
          %p148 = scmp.lt.s32.totalorder %s19, 1
          %s149 = scalar_select %p148, %s19, 1
          %s150 = smul.addr %s149, 54
          %s151 = smul.addr %s150, 4
          %s152 = scalar_lea.vmem %s0, %s151
        $region28: #{tpu_custom_call.1} parent=23 // pred_fallthru
          _
      $region24: #{tpu_custom_call.1} parent=5 // pred_fallthru
        _
      %p153 = scmp.le.s32.totalorder 1, %s12
      %p154 = scmp.lt.s32.totalorder %s12, 5
      %p155 = pnand %p153, %p154
      %p156 = pneg %p155
      // Predicated region
      $region29: #{tpu_custom_call.1} parent=5 // pred_check
        _
      $region30: #{tpu_custom_call.1} parent=5 // pred_check_branch
        %158 = sbr.rel (%p155) target = $region32
      $region31: #{tpu_custom_call.1} parent=5 // pred_region
        %s159 = ssub.s32 %s12, 1
        %p160 = scmp.lt.s32.totalorder %s21, 1
        %s161 = scalar_select %p160, %s21, 1
        %s162 = smul.addr %s161, 54
        %s163 = smul.addr %s162, 4
        %s164 = scalar_lea.vmem %s0, %s163
        %p165 = pneg %p50
        %p166 = pneg %p47
        %p167 = pneg %p71
        %p168 = pneg %p68
        %p169 = pneg %p92
        %p170 = pneg %p89
        %p171 = pneg %p120
        %p172 = pneg %p117
        %s173 = sand.u32 %s107, 1
        %s174 = scalar_lea.sflag [#allocation4], %s173
        %s175 = sand.u32 %s107, 1
        %s176 = smul.addr %s175, 128
        %s177 = scalar_lea.vmem [#allocation3], %s176
        %p178 = scmp.lt.s32.totalorder %s21, 1
        %s179 = scalar_select %p178, %s21, 1
        %s180 = smul.addr %s179, 54
        %s181 = smul.addr %s180, 4
        %s182 = scalar_lea.vmem %s0, %s181
        %s183 = smul.u32 16, %s22
        %s185 = smul.u32 %s22, 8
        %s186 = smul.u32 %s185, 3
        %s187 = smul.addr %s186, 4
        %s188 = scalar_lea.vmem %s182, %s187
        %v189 = vld [vmem:[%s188] sm:$0xf]
        %v190 = vld [vmem:[%s188 + $0x4] sm:$0xf]
        %v191 = vld [vmem:[%s188 + $0x8] sm:$0x1]
        %v192 = vld [vmem:[%s188 + $0xc] sm:$0xf]
        %v193 = vld [vmem:[%s188 + $0x10] sm:$0xf]
        %v194 = vld [vmem:[%s188 + $0x14] sm:$0x1]
        %v195 = vld [vmem:[%s188 + $0x18] sm:$0xf]
        %v196 = vld [vmem:[%s188 + $0x1c] sm:$0xf]
        %v197 = vld [vmem:[%s188 + $0x20] sm:$0x1]
        %v198 = vld [vmem:[%s188 + $0x24] sm:$0xf]
        %v199 = vld [vmem:[%s188 + $0x28] sm:$0xf]
        %v200 = vld [vmem:[%s188 + $0x2c] sm:$0x1]
        %v201 = vld [vmem:[%s188 + $0x30] sm:$0xf]
        %v202 = vld [vmem:[%s188 + $0x34] sm:$0xf]
        %v203 = vld [vmem:[%s188 + $0x38] sm:$0x1]
        %v204 = vld [vmem:[%s188 + $0x3c] sm:$0xf]
        %v205 = vld [vmem:[%s188 + $0x40] sm:$0xf]
        %v206 = vld [vmem:[%s188 + $0x44] sm:$0x1]
        %v207 = vld [vmem:[%s188 + $0x48] sm:$0xf]
        %v208 = vld [vmem:[%s188 + $0x4c] sm:$0xf]
        %v209 = vld [vmem:[%s188 + $0x50] sm:$0x1]
        %v210 = vld [vmem:[%s188 + $0x54] sm:$0xf]
        %v211 = vld [vmem:[%s188 + $0x58] sm:$0xf]
        %v212 = vld [vmem:[%s188 + $0x5c] sm:$0x1]
        %v213 = vld [vmem:[%s188 + $0x60] sm:$0xf]
        %v214 = vld [vmem:[%s188 + $0x64] sm:$0xf]
        %v215 = vld [vmem:[%s188 + $0x68] sm:$0x1]
        %v216 = vld [vmem:[%s188 + $0x6c] sm:$0xf]
        %v217 = vld [vmem:[%s188 + $0x70] sm:$0xf]
        %v218 = vld [vmem:[%s188 + $0x74] sm:$0x1]
        %vm219 = vcmask 27648
        %220 = vst.msk [vmem:[#allocation2] sm:$0xf] %vm219, %v189
        %221 = vst.msk [vmem:[#allocation2 + $0x4] sm:$0xf] %vm219, %v190
        %222 = vst.msk [vmem:[#allocation2 + $0x8] sm:$0xf] %vm219, %v192
        %223 = vst.msk [vmem:[#allocation2 + $0xc] sm:$0xf] %vm219, %v193
        %224 = vst.msk [vmem:[#allocation2 + $0x10] sm:$0xf] %vm219, %v195
        %225 = vst.msk [vmem:[#allocation2 + $0x14] sm:$0xf] %vm219, %v196
        %226 = vst.msk [vmem:[#allocation2 + $0x18] sm:$0xf] %vm219, %v198
        %227 = vst.msk [vmem:[#allocation2 + $0x1c] sm:$0xf] %vm219, %v199
        %228 = vst.msk [vmem:[#allocation2 + $0x20] sm:$0xf] %vm219, %v201
        %229 = vst.msk [vmem:[#allocation2 + $0x24] sm:$0xf] %vm219, %v202
        %230 = vst.msk [vmem:[#allocation2 + $0x28] sm:$0xf] %vm219, %v204
        %231 = vst.msk [vmem:[#allocation2 + $0x2c] sm:$0xf] %vm219, %v205
        %232 = vst.msk [vmem:[#allocation2 + $0x30] sm:$0xf] %vm219, %v207
        %233 = vst.msk [vmem:[#allocation2 + $0x34] sm:$0xf] %vm219, %v208
        %234 = vst.msk [vmem:[#allocation2 + $0x38] sm:$0xf] %vm219, %v210
        %235 = vst.msk [vmem:[#allocation2 + $0x3c] sm:$0xf] %vm219, %v211
        %vm236 = vsmask.f32 3328
        %vm237 = vsmask.f32 7440
        %vm238 = vmor %vm236, %vm237
        %v240 = vshrl.u32 %v189, 16
        %v242 = vrot.slane %v240, 4
        %v243 = vshll.u32 %v189, 16
        %v245 = vrot.slane %v243, 5
        %v246 = vor.u32 %v242, %v245
        %v247 = vrot.slane %v246, 4
        %v249 = vshll.u32 %v190, 16
        %v251 = vrot.slane %v249, 5
        %v252 = vsel %vm238, %v247, %v251
        %v253 = vshrl.u32 %v190, 16
        %v255 = vrot.slane %v253, 4
        %v256 = vor.u32 %v255, %v251
        %v257 = vrot.slane %v256, 4
        %v259 = vshll.u32 %v191, 16
        %v261 = vrot.slane %v259, 5
        %v262 = vsel %vm238, %v257, %v261
        %v264 = vshrl.u32 %v192, 16
        %v266 = vrot.slane %v264, 4
        %v267 = vshll.u32 %v192, 16
        %v269 = vrot.slane %v267, 5
        %v270 = vor.u32 %v266, %v269
        %v271 = vrot.slane %v270, 4
        %v273 = vshll.u32 %v193, 16
        %v275 = vrot.slane %v273, 5
        %v276 = vsel %vm238, %v271, %v275
        %v277 = vshrl.u32 %v193, 16
        %v279 = vrot.slane %v277, 4
        %v280 = vor.u32 %v279, %v275
        %v281 = vrot.slane %v280, 4
        %v283 = vshll.u32 %v194, 16
        %v285 = vrot.slane %v283, 5
        %v286 = vsel %vm238, %v281, %v285
        %v288 = vshrl.u32 %v195, 16
        %v290 = vrot.slane %v288, 4
        %v291 = vshll.u32 %v195, 16
        %v293 = vrot.slane %v291, 5
        %v294 = vor.u32 %v290, %v293
        %v295 = vrot.slane %v294, 4
        %v297 = vshll.u32 %v196, 16
        %v299 = vrot.slane %v297, 5
        %v300 = vsel %vm238, %v295, %v299
        %v301 = vshrl.u32 %v196, 16
        %v303 = vrot.slane %v301, 4
        %v304 = vor.u32 %v303, %v299
        %v305 = vrot.slane %v304, 4
        %v307 = vshll.u32 %v197, 16
        %v309 = vrot.slane %v307, 5
        %v310 = vsel %vm238, %v305, %v309
        %v312 = vshrl.u32 %v198, 16
        %v314 = vrot.slane %v312, 4
        %v315 = vshll.u32 %v198, 16
        %v317 = vrot.slane %v315, 5
        %v318 = vor.u32 %v314, %v317
        %v319 = vrot.slane %v318, 4
        %v321 = vshll.u32 %v199, 16
        %v323 = vrot.slane %v321, 5
        %v324 = vsel %vm238, %v319, %v323
        %v325 = vshrl.u32 %v199, 16
        %v327 = vrot.slane %v325, 4
        %v328 = vor.u32 %v327, %v323
        %v329 = vrot.slane %v328, 4
        %v331 = vshll.u32 %v200, 16
        %v333 = vrot.slane %v331, 5
        %v334 = vsel %vm238, %v329, %v333
        %v336 = vshrl.u32 %v201, 16
        %v338 = vrot.slane %v336, 4
        %v339 = vshll.u32 %v201, 16
        %v341 = vrot.slane %v339, 5
        %v342 = vor.u32 %v338, %v341
        %v343 = vrot.slane %v342, 4
        %v345 = vshll.u32 %v202, 16
        %v347 = vrot.slane %v345, 5
        %v348 = vsel %vm238, %v343, %v347
        %v349 = vshrl.u32 %v202, 16
        %v351 = vrot.slane %v349, 4
        %v352 = vor.u32 %v351, %v347
        %v353 = vrot.slane %v352, 4
        %v355 = vshll.u32 %v203, 16
        %v357 = vrot.slane %v355, 5
        %v358 = vsel %vm238, %v353, %v357
        %v360 = vshrl.u32 %v204, 16
        %v362 = vrot.slane %v360, 4
        %v363 = vshll.u32 %v204, 16
        %v365 = vrot.slane %v363, 5
        %v366 = vor.u32 %v362, %v365
        %v367 = vrot.slane %v366, 4
        %v369 = vshll.u32 %v205, 16
        %v371 = vrot.slane %v369, 5
        %v372 = vsel %vm238, %v367, %v371
        %v373 = vshrl.u32 %v205, 16
        %v375 = vrot.slane %v373, 4
        %v376 = vor.u32 %v375, %v371
        %v377 = vrot.slane %v376, 4
        %v379 = vshll.u32 %v206, 16
        %v381 = vrot.slane %v379, 5
        %v382 = vsel %vm238, %v377, %v381
        %v384 = vshrl.u32 %v207, 16
        %v386 = vrot.slane %v384, 4
        %v387 = vshll.u32 %v207, 16
        %v389 = vrot.slane %v387, 5
        %v390 = vor.u32 %v386, %v389
        %v391 = vrot.slane %v390, 4
        %v393 = vshll.u32 %v208, 16
        %v395 = vrot.slane %v393, 5
        %v396 = vsel %vm238, %v391, %v395
        %v397 = vshrl.u32 %v208, 16
        %v399 = vrot.slane %v397, 4
        %v400 = vor.u32 %v399, %v395
        %v401 = vrot.slane %v400, 4
        %v403 = vshll.u32 %v209, 16
        %v405 = vrot.slane %v403, 5
        %v406 = vsel %vm238, %v401, %v405
        %v408 = vshrl.u32 %v210, 16
        %v410 = vrot.slane %v408, 4
        %v411 = vshll.u32 %v210, 16
        %v413 = vrot.slane %v411, 5
        %v414 = vor.u32 %v410, %v413
        %v415 = vrot.slane %v414, 4
        %v417 = vshll.u32 %v211, 16
        %v419 = vrot.slane %v417, 5
        %v420 = vsel %vm238, %v415, %v419
        %v421 = vshrl.u32 %v211, 16
        %v423 = vrot.slane %v421, 4
        %v424 = vor.u32 %v423, %v419
        %v425 = vrot.slane %v424, 4
        %v427 = vshll.u32 %v212, 16
        %v429 = vrot.slane %v427, 5
        %v430 = vsel %vm238, %v425, %v429
        %431 = vrot.lane.b32.xlu0 %v252, 4
        %v432 = vpop.permute.xlu0 %431
        %433 = vrot.lane.b32.xlu0 %v262, 4
        %v434 = vpop.permute.xlu0 %433
        %435 = vrot.lane.b32.xlu0 %v276, 4
        %v436 = vpop.permute.xlu0 %435
        %437 = vrot.lane.b32.xlu0 %v286, 4
        %v438 = vpop.permute.xlu0 %437
        %439 = vrot.lane.b32.xlu0 %v300, 4
        %v440 = vpop.permute.xlu0 %439
        %441 = vrot.lane.b32.xlu0 %v310, 4
        %v442 = vpop.permute.xlu0 %441
        %443 = vrot.lane.b32.xlu0 %v324, 4
        %v444 = vpop.permute.xlu0 %443
        %445 = vrot.lane.b32.xlu0 %v334, 4
        %v446 = vpop.permute.xlu0 %445
        %447 = vrot.lane.b32.xlu0 %v348, 4
        %v448 = vpop.permute.xlu0 %447
        %449 = vrot.lane.b32.xlu0 %v358, 4
        %v450 = vpop.permute.xlu0 %449
        %451 = vrot.lane.b32.xlu0 %v372, 4
        %v452 = vpop.permute.xlu0 %451
        %453 = vrot.lane.b32.xlu0 %v382, 4
        %v454 = vpop.permute.xlu0 %453
        %455 = vrot.lane.b32.xlu0 %v396, 4
        %v456 = vpop.permute.xlu0 %455
        %457 = vrot.lane.b32.xlu0 %v406, 4
        %v458 = vpop.permute.xlu0 %457
        %459 = vrot.lane.b32.xlu0 %v420, 4
        %v460 = vpop.permute.xlu0 %459
        %461 = vrot.lane.b32.xlu0 %v430, 4
        %v462 = vpop.permute.xlu0 %461
        %vm479 = vcmask 60448
        %480 = vst.msk [vmem:[#allocation2] sm:$0xf] %vm479, %v432
        %481 = vst.msk [vmem:[#allocation2 + $0x4] sm:$0xf] %vm479, %v434
        %482 = vst.msk [vmem:[#allocation2 + $0x8] sm:$0xf] %vm479, %v436
        %483 = vst.msk [vmem:[#allocation2 + $0xc] sm:$0xf] %vm479, %v438
        %484 = vst.msk [vmem:[#allocation2 + $0x10] sm:$0xf] %vm479, %v440
        %485 = vst.msk [vmem:[#allocation2 + $0x14] sm:$0xf] %vm479, %v442
        %486 = vst.msk [vmem:[#allocation2 + $0x18] sm:$0xf] %vm479, %v444
        %487 = vst.msk [vmem:[#allocation2 + $0x1c] sm:$0xf] %vm479, %v446
        %488 = vst.msk [vmem:[#allocation2 + $0x20] sm:$0xf] %vm479, %v448
        %489 = vst.msk [vmem:[#allocation2 + $0x24] sm:$0xf] %vm479, %v450
        %490 = vst.msk [vmem:[#allocation2 + $0x28] sm:$0xf] %vm479, %v452
        %491 = vst.msk [vmem:[#allocation2 + $0x2c] sm:$0xf] %vm479, %v454
        %492 = vst.msk [vmem:[#allocation2 + $0x30] sm:$0xf] %vm479, %v456
        %493 = vst.msk [vmem:[#allocation2 + $0x34] sm:$0xf] %vm479, %v458
        %494 = vst.msk [vmem:[#allocation2 + $0x38] sm:$0xf] %vm479, %v460
        %495 = vst.msk [vmem:[#allocation2 + $0x3c] sm:$0xf] %vm479, %v462
        %vm520 = vcmask 1042432
        %vm521 = vcmask 1046532
        %vm522 = vmor %vm520, %vm521
        %v523 = vrot.slane %v189, 5
        %v524 = vrot.slane %v523, 4
        %v525 = vrot.slane %v190, 5
        %v526 = vsel %vm522, %v524, %v525
        %v527 = vrot.slane %v525, 4
        %v528 = vrot.slane %v191, 5
        %v529 = vsel %vm522, %v527, %v528
        %v530 = vrot.slane %v192, 5
        %v531 = vrot.slane %v530, 4
        %v532 = vrot.slane %v193, 5
        %v533 = vsel %vm522, %v531, %v532
        %v534 = vrot.slane %v532, 4
        %v535 = vrot.slane %v194, 5
        %v536 = vsel %vm522, %v534, %v535
        %v537 = vrot.slane %v195, 5
        %v538 = vrot.slane %v537, 4
        %v539 = vrot.slane %v196, 5
        %v540 = vsel %vm522, %v538, %v539
        %v541 = vrot.slane %v539, 4
        %v542 = vrot.slane %v197, 5
        %v543 = vsel %vm522, %v541, %v542
        %v544 = vrot.slane %v198, 5
        %v545 = vrot.slane %v544, 4
        %v546 = vrot.slane %v199, 5
        %v547 = vsel %vm522, %v545, %v546
        %v548 = vrot.slane %v546, 4
        %v549 = vrot.slane %v200, 5
        %v550 = vsel %vm522, %v548, %v549
        %v551 = vrot.slane %v201, 5
        %v552 = vrot.slane %v551, 4
        %v553 = vrot.slane %v202, 5
        %v554 = vsel %vm522, %v552, %v553
        %v555 = vrot.slane %v553, 4
        %v556 = vrot.slane %v203, 5
        %v557 = vsel %vm522, %v555, %v556
        %v558 = vrot.slane %v204, 5
        %v559 = vrot.slane %v558, 4
        %v560 = vrot.slane %v205, 5
        %v561 = vsel %vm522, %v559, %v560
        %v562 = vrot.slane %v560, 4
        %v563 = vrot.slane %v206, 5
        %v564 = vsel %vm522, %v562, %v563
        %v565 = vrot.slane %v207, 5
        %v566 = vrot.slane %v565, 4
        %v567 = vrot.slane %v208, 5
        %v568 = vsel %vm522, %v566, %v567
        %v569 = vrot.slane %v567, 4
        %v570 = vrot.slane %v209, 5
        %v571 = vsel %vm522, %v569, %v570
        %v572 = vrot.slane %v210, 5
        %v573 = vrot.slane %v572, 4
        %v574 = vrot.slane %v211, 5
        %v575 = vsel %vm522, %v573, %v574
        %v576 = vrot.slane %v574, 4
        %v577 = vrot.slane %v212, 5
        %v578 = vsel %vm522, %v576, %v577
        %579 = vrot.lane.b32.xlu0 %v526, 8
        %v580 = vpop.permute.xlu0 %579
        %581 = vrot.lane.b32.xlu0 %v529, 8
        %v582 = vpop.permute.xlu0 %581
        %583 = vrot.lane.b32.xlu0 %v533, 8
        %v584 = vpop.permute.xlu0 %583
        %585 = vrot.lane.b32.xlu0 %v536, 8
        %v586 = vpop.permute.xlu0 %585
        %587 = vrot.lane.b32.xlu0 %v540, 8
        %v588 = vpop.permute.xlu0 %587
        %589 = vrot.lane.b32.xlu0 %v543, 8
        %v590 = vpop.permute.xlu0 %589
        %591 = vrot.lane.b32.xlu0 %v547, 8
        %v592 = vpop.permute.xlu0 %591
        %593 = vrot.lane.b32.xlu0 %v550, 8
        %v594 = vpop.permute.xlu0 %593
        %595 = vrot.lane.b32.xlu0 %v554, 8
        %v596 = vpop.permute.xlu0 %595
        %597 = vrot.lane.b32.xlu0 %v557, 8
        %v598 = vpop.permute.xlu0 %597
        %599 = vrot.lane.b32.xlu0 %v561, 8
        %v600 = vpop.permute.xlu0 %599
        %601 = vrot.lane.b32.xlu0 %v564, 8
        %v602 = vpop.permute.xlu0 %601
        %603 = vrot.lane.b32.xlu0 %v568, 8
        %v604 = vpop.permute.xlu0 %603
        %605 = vrot.lane.b32.xlu0 %v571, 8
        %v606 = vpop.permute.xlu0 %605
        %607 = vrot.lane.b32.xlu0 %v575, 8
        %v608 = vpop.permute.xlu0 %607
        %609 = vrot.lane.b32.xlu0 %v578, 8
        %v610 = vpop.permute.xlu0 %609
        %vm627 = vcmask 93248
        %628 = vst.msk [vmem:[#allocation2] sm:$0xf] %vm627, %v580
        %629 = vst.msk [vmem:[#allocation2 + $0x4] sm:$0xf] %vm627, %v582
        %630 = vst.msk [vmem:[#allocation2 + $0x8] sm:$0xf] %vm627, %v584
        %631 = vst.msk [vmem:[#allocation2 + $0xc] sm:$0xf] %vm627, %v586
        %632 = vst.msk [vmem:[#allocation2 + $0x10] sm:$0xf] %vm627, %v588
        %633 = vst.msk [vmem:[#allocation2 + $0x14] sm:$0xf] %vm627, %v590
        %634 = vst.msk [vmem:[#allocation2 + $0x18] sm:$0xf] %vm627, %v592
        %635 = vst.msk [vmem:[#allocation2 + $0x1c] sm:$0xf] %vm627, %v594
        %636 = vst.msk [vmem:[#allocation2 + $0x20] sm:$0xf] %vm627, %v596
        %637 = vst.msk [vmem:[#allocation2 + $0x24] sm:$0xf] %vm627, %v598
        %638 = vst.msk [vmem:[#allocation2 + $0x28] sm:$0xf] %vm627, %v600
        %639 = vst.msk [vmem:[#allocation2 + $0x2c] sm:$0xf] %vm627, %v602
        %640 = vst.msk [vmem:[#allocation2 + $0x30] sm:$0xf] %vm627, %v604
        %641 = vst.msk [vmem:[#allocation2 + $0x34] sm:$0xf] %vm627, %v606
        %642 = vst.msk [vmem:[#allocation2 + $0x38] sm:$0xf] %vm627, %v608
        %643 = vst.msk [vmem:[#allocation2 + $0x3c] sm:$0xf] %vm627, %v610
        %646 = vrot.lane.b32.xlu0 %v192, 12
        %v647 = vpop.permute.xlu0 %646
        %648 = vrot.lane.b32.xlu0 %v193, 12
        %v649 = vpop.permute.xlu0 %648
        %650 = vrot.lane.b32.xlu0 %v195, 12
        %v651 = vpop.permute.xlu0 %650
        %652 = vrot.lane.b32.xlu0 %v196, 12
        %v653 = vpop.permute.xlu0 %652
        %654 = vrot.lane.b32.xlu0 %v198, 12
        %v655 = vpop.permute.xlu0 %654
        %656 = vrot.lane.b32.xlu0 %v199, 12
        %v657 = vpop.permute.xlu0 %656
        %658 = vrot.lane.b32.xlu0 %v201, 12
        %v659 = vpop.permute.xlu0 %658
        %660 = vrot.lane.b32.xlu0 %v202, 12
        %v661 = vpop.permute.xlu0 %660
        %662 = vrot.lane.b32.xlu0 %v204, 12
        %v663 = vpop.permute.xlu0 %662
        %664 = vrot.lane.b32.xlu0 %v205, 12
        %v665 = vpop.permute.xlu0 %664
        %666 = vrot.lane.b32.xlu0 %v207, 12
        %v667 = vpop.permute.xlu0 %666
        %668 = vrot.lane.b32.xlu0 %v208, 12
        %v669 = vpop.permute.xlu0 %668
        %670 = vrot.lane.b32.xlu0 %v210, 12
        %v671 = vpop.permute.xlu0 %670
        %672 = vrot.lane.b32.xlu0 %v211, 12
        %v673 = vpop.permute.xlu0 %672
        %674 = vrot.lane.b32.xlu0 %v213, 12
        %v675 = vpop.permute.xlu0 %674
        %676 = vrot.lane.b32.xlu0 %v214, 12
        %v677 = vpop.permute.xlu0 %676
        %vm694 = vcmask 126048
        %695 = vst.msk [vmem:[#allocation2] sm:$0xf] %vm694, %v647
        %696 = vst.msk [vmem:[#allocation2 + $0x4] sm:$0xf] %vm694, %v649
        %697 = vst.msk [vmem:[#allocation2 + $0x8] sm:$0xf] %vm694, %v651
        %698 = vst.msk [vmem:[#allocation2 + $0xc] sm:$0xf] %vm694, %v653
        %699 = vst.msk [vmem:[#allocation2 + $0x10] sm:$0xf] %vm694, %v655
        %700 = vst.msk [vmem:[#allocation2 + $0x14] sm:$0xf] %vm694, %v657
        %701 = vst.msk [vmem:[#allocation2 + $0x18] sm:$0xf] %vm694, %v659
        %702 = vst.msk [vmem:[#allocation2 + $0x1c] sm:$0xf] %vm694, %v661
        %703 = vst.msk [vmem:[#allocation2 + $0x20] sm:$0xf] %vm694, %v663
        %704 = vst.msk [vmem:[#allocation2 + $0x24] sm:$0xf] %vm694, %v665
        %705 = vst.msk [vmem:[#allocation2 + $0x28] sm:$0xf] %vm694, %v667
        %706 = vst.msk [vmem:[#allocation2 + $0x2c] sm:$0xf] %vm694, %v669
        %707 = vst.msk [vmem:[#allocation2 + $0x30] sm:$0xf] %vm694, %v671
        %708 = vst.msk [vmem:[#allocation2 + $0x34] sm:$0xf] %vm694, %v673
        %709 = vst.msk [vmem:[#allocation2 + $0x38] sm:$0xf] %vm694, %v675
        %710 = vst.msk [vmem:[#allocation2 + $0x3c] sm:$0xf] %vm694, %v677
        %v712 = vshrl.u32 %v213, 16
        %v714 = vrot.slane %v712, 4
        %v715 = vshll.u32 %v213, 16
        %v717 = vrot.slane %v715, 5
        %v718 = vor.u32 %v714, %v717
        %v719 = vrot.slane %v718, 4
        %v721 = vshll.u32 %v214, 16
        %v723 = vrot.slane %v721, 5
        %v724 = vsel %vm238, %v719, %v723
        %v725 = vshrl.u32 %v214, 16
        %v727 = vrot.slane %v725, 4
        %v728 = vor.u32 %v727, %v723
        %v729 = vrot.slane %v728, 4
        %v731 = vshll.u32 %v215, 16
        %v733 = vrot.slane %v731, 5
        %v734 = vsel %vm238, %v729, %v733
        %735 = vrot.lane.b32.xlu0 %v276, 16
        %v736 = vpop.permute.xlu0 %735
        %737 = vrot.lane.b32.xlu0 %v286, 16
        %v738 = vpop.permute.xlu0 %737
        %739 = vrot.lane.b32.xlu0 %v300, 16
        %v740 = vpop.permute.xlu0 %739
        %741 = vrot.lane.b32.xlu0 %v310, 16
        %v742 = vpop.permute.xlu0 %741
        %743 = vrot.lane.b32.xlu0 %v324, 16
        %v744 = vpop.permute.xlu0 %743
        %745 = vrot.lane.b32.xlu0 %v334, 16
        %v746 = vpop.permute.xlu0 %745
        %747 = vrot.lane.b32.xlu0 %v348, 16
        %v748 = vpop.permute.xlu0 %747
        %749 = vrot.lane.b32.xlu0 %v358, 16
        %v750 = vpop.permute.xlu0 %749
        %751 = vrot.lane.b32.xlu0 %v372, 16
        %v752 = vpop.permute.xlu0 %751
        %753 = vrot.lane.b32.xlu0 %v382, 16
        %v754 = vpop.permute.xlu0 %753
        %755 = vrot.lane.b32.xlu0 %v396, 16
        %v756 = vpop.permute.xlu0 %755
        %757 = vrot.lane.b32.xlu0 %v406, 16
        %v758 = vpop.permute.xlu0 %757
        %759 = vrot.lane.b32.xlu0 %v420, 16
        %v760 = vpop.permute.xlu0 %759
        %761 = vrot.lane.b32.xlu0 %v430, 16
        %v762 = vpop.permute.xlu0 %761
        %763 = vrot.lane.b32.xlu0 %v724, 16
        %v764 = vpop.permute.xlu0 %763
        %765 = vrot.lane.b32.xlu0 %v734, 16
        %v766 = vpop.permute.xlu0 %765
        %vm783 = vcmask 158848
        %784 = vst.msk [vmem:[#allocation2] sm:$0xf] %vm783, %v736
        %785 = vst.msk [vmem:[#allocation2 + $0x4] sm:$0xf] %vm783, %v738
        %786 = vst.msk [vmem:[#allocation2 + $0x8] sm:$0xf] %vm783, %v740
        %787 = vst.msk [vmem:[#allocation2 + $0xc] sm:$0xf] %vm783, %v742
        %788 = vst.msk [vmem:[#allocation2 + $0x10] sm:$0xf] %vm783, %v744
        %789 = vst.msk [vmem:[#allocation2 + $0x14] sm:$0xf] %vm783, %v746
        %790 = vst.msk [vmem:[#allocation2 + $0x18] sm:$0xf] %vm783, %v748
        %791 = vst.msk [vmem:[#allocation2 + $0x1c] sm:$0xf] %vm783, %v750
        %792 = vst.msk [vmem:[#allocation2 + $0x20] sm:$0xf] %vm783, %v752
        %793 = vst.msk [vmem:[#allocation2 + $0x24] sm:$0xf] %vm783, %v754
        %794 = vst.msk [vmem:[#allocation2 + $0x28] sm:$0xf] %vm783, %v756
        %795 = vst.msk [vmem:[#allocation2 + $0x2c] sm:$0xf] %vm783, %v758
        %796 = vst.msk [vmem:[#allocation2 + $0x30] sm:$0xf] %vm783, %v760
        %797 = vst.msk [vmem:[#allocation2 + $0x34] sm:$0xf] %vm783, %v762
        %798 = vst.msk [vmem:[#allocation2 + $0x38] sm:$0xf] %vm783, %v764
        %799 = vst.msk [vmem:[#allocation2 + $0x3c] sm:$0xf] %vm783, %v766
        %v801 = vrot.slane %v213, 5
        %v802 = vrot.slane %v801, 4
        %v803 = vrot.slane %v214, 5
        %v804 = vsel %vm522, %v802, %v803
        %v805 = vrot.slane %v803, 4
        %v806 = vrot.slane %v215, 5
        %v807 = vsel %vm522, %v805, %v806
        %808 = vrot.lane.b32.xlu0 %v533, 20
        %v809 = vpop.permute.xlu0 %808
        %810 = vrot.lane.b32.xlu0 %v536, 20
        %v811 = vpop.permute.xlu0 %810
        %812 = vrot.lane.b32.xlu0 %v540, 20
        %v813 = vpop.permute.xlu0 %812
        %814 = vrot.lane.b32.xlu0 %v543, 20
        %v815 = vpop.permute.xlu0 %814
        %816 = vrot.lane.b32.xlu0 %v547, 20
        %v817 = vpop.permute.xlu0 %816
        %818 = vrot.lane.b32.xlu0 %v550, 20
        %v819 = vpop.permute.xlu0 %818
        %820 = vrot.lane.b32.xlu0 %v554, 20
        %v821 = vpop.permute.xlu0 %820
        %822 = vrot.lane.b32.xlu0 %v557, 20
        %v823 = vpop.permute.xlu0 %822
        %824 = vrot.lane.b32.xlu0 %v561, 20
        %v825 = vpop.permute.xlu0 %824
        %826 = vrot.lane.b32.xlu0 %v564, 20
        %v827 = vpop.permute.xlu0 %826
        %828 = vrot.lane.b32.xlu0 %v568, 20
        %v829 = vpop.permute.xlu0 %828
        %830 = vrot.lane.b32.xlu0 %v571, 20
        %v831 = vpop.permute.xlu0 %830
        %832 = vrot.lane.b32.xlu0 %v575, 20
        %v833 = vpop.permute.xlu0 %832
        %834 = vrot.lane.b32.xlu0 %v578, 20
        %v835 = vpop.permute.xlu0 %834
        %836 = vrot.lane.b32.xlu0 %v804, 20
        %v837 = vpop.permute.xlu0 %836
        %838 = vrot.lane.b32.xlu0 %v807, 20
        %v839 = vpop.permute.xlu0 %838
        %vm856 = vcmask 191648
        %857 = vst.msk [vmem:[#allocation2] sm:$0xf] %vm856, %v809
        %858 = vst.msk [vmem:[#allocation2 + $0x4] sm:$0xf] %vm856, %v811
        %859 = vst.msk [vmem:[#allocation2 + $0x8] sm:$0xf] %vm856, %v813
        %860 = vst.msk [vmem:[#allocation2 + $0xc] sm:$0xf] %vm856, %v815
        %861 = vst.msk [vmem:[#allocation2 + $0x10] sm:$0xf] %vm856, %v817
        %862 = vst.msk [vmem:[#allocation2 + $0x14] sm:$0xf] %vm856, %v819
        %863 = vst.msk [vmem:[#allocation2 + $0x18] sm:$0xf] %vm856, %v821
        %864 = vst.msk [vmem:[#allocation2 + $0x1c] sm:$0xf] %vm856, %v823
        %865 = vst.msk [vmem:[#allocation2 + $0x20] sm:$0xf] %vm856, %v825
        %866 = vst.msk [vmem:[#allocation2 + $0x24] sm:$0xf] %vm856, %v827
        %867 = vst.msk [vmem:[#allocation2 + $0x28] sm:$0xf] %vm856, %v829
        %868 = vst.msk [vmem:[#allocation2 + $0x2c] sm:$0xf] %vm856, %v831
        %869 = vst.msk [vmem:[#allocation2 + $0x30] sm:$0xf] %vm856, %v833
        %870 = vst.msk [vmem:[#allocation2 + $0x34] sm:$0xf] %vm856, %v835
        %871 = vst.msk [vmem:[#allocation2 + $0x38] sm:$0xf] %vm856, %v837
        %872 = vst.msk [vmem:[#allocation2 + $0x3c] sm:$0xf] %vm856, %v839
        %875 = vrot.lane.b32.xlu0 %v195, 24
        %v876 = vpop.permute.xlu0 %875
        %877 = vrot.lane.b32.xlu0 %v196, 24
        %v878 = vpop.permute.xlu0 %877
        %879 = vrot.lane.b32.xlu0 %v198, 24
        %v880 = vpop.permute.xlu0 %879
        %881 = vrot.lane.b32.xlu0 %v199, 24
        %v882 = vpop.permute.xlu0 %881
        %883 = vrot.lane.b32.xlu0 %v201, 24
        %v884 = vpop.permute.xlu0 %883
        %885 = vrot.lane.b32.xlu0 %v202, 24
        %v886 = vpop.permute.xlu0 %885
        %887 = vrot.lane.b32.xlu0 %v204, 24
        %v888 = vpop.permute.xlu0 %887
        %889 = vrot.lane.b32.xlu0 %v205, 24
        %v890 = vpop.permute.xlu0 %889
        %891 = vrot.lane.b32.xlu0 %v207, 24
        %v892 = vpop.permute.xlu0 %891
        %893 = vrot.lane.b32.xlu0 %v208, 24
        %v894 = vpop.permute.xlu0 %893
        %895 = vrot.lane.b32.xlu0 %v210, 24
        %v896 = vpop.permute.xlu0 %895
        %897 = vrot.lane.b32.xlu0 %v211, 24
        %v898 = vpop.permute.xlu0 %897
        %899 = vrot.lane.b32.xlu0 %v213, 24
        %v900 = vpop.permute.xlu0 %899
        %901 = vrot.lane.b32.xlu0 %v214, 24
        %v902 = vpop.permute.xlu0 %901
        %903 = vrot.lane.b32.xlu0 %v216, 24
        %v904 = vpop.permute.xlu0 %903
        %905 = vrot.lane.b32.xlu0 %v217, 24
        %v906 = vpop.permute.xlu0 %905
        %vm923 = vcmask 224448
        %924 = vst.msk [vmem:[#allocation2] sm:$0xf] %vm923, %v876
        %925 = vst.msk [vmem:[#allocation2 + $0x4] sm:$0xf] %vm923, %v878
        %926 = vst.msk [vmem:[#allocation2 + $0x8] sm:$0xf] %vm923, %v880
        %927 = vst.msk [vmem:[#allocation2 + $0xc] sm:$0xf] %vm923, %v882
        %928 = vst.msk [vmem:[#allocation2 + $0x10] sm:$0xf] %vm923, %v884
        %929 = vst.msk [vmem:[#allocation2 + $0x14] sm:$0xf] %vm923, %v886
        %930 = vst.msk [vmem:[#allocation2 + $0x18] sm:$0xf] %vm923, %v888
        %931 = vst.msk [vmem:[#allocation2 + $0x1c] sm:$0xf] %vm923, %v890
        %932 = vst.msk [vmem:[#allocation2 + $0x20] sm:$0xf] %vm923, %v892
        %933 = vst.msk [vmem:[#allocation2 + $0x24] sm:$0xf] %vm923, %v894
        %934 = vst.msk [vmem:[#allocation2 + $0x28] sm:$0xf] %vm923, %v896
        %935 = vst.msk [vmem:[#allocation2 + $0x2c] sm:$0xf] %vm923, %v898
        %936 = vst.msk [vmem:[#allocation2 + $0x30] sm:$0xf] %vm923, %v900
        %937 = vst.msk [vmem:[#allocation2 + $0x34] sm:$0xf] %vm923, %v902
        %938 = vst.msk [vmem:[#allocation2 + $0x38] sm:$0xf] %vm923, %v904
        %939 = vst.msk [vmem:[#allocation2 + $0x3c] sm:$0xf] %vm923, %v906
        %v941 = vshrl.u32 %v216, 16
        %v943 = vrot.slane %v941, 4
        %v944 = vshll.u32 %v216, 16
        %v946 = vrot.slane %v944, 5
        %v947 = vor.u32 %v943, %v946
        %v948 = vrot.slane %v947, 4
        %v950 = vshll.u32 %v217, 16
        %v952 = vrot.slane %v950, 5
        %v953 = vsel %vm238, %v948, %v952
        %v954 = vshrl.u32 %v217, 16
        %v956 = vrot.slane %v954, 4
        %v957 = vor.u32 %v956, %v952
        %v958 = vrot.slane %v957, 4
        %v960 = vshll.u32 %v218, 16
        %v962 = vrot.slane %v960, 5
        %v963 = vsel %vm238, %v958, %v962
        %964 = vrot.lane.b32.xlu0 %v300, 28
        %v965 = vpop.permute.xlu0 %964
        %966 = vrot.lane.b32.xlu0 %v310, 28
        %v967 = vpop.permute.xlu0 %966
        %968 = vrot.lane.b32.xlu0 %v324, 28
        %v969 = vpop.permute.xlu0 %968
        %970 = vrot.lane.b32.xlu0 %v334, 28
        %v971 = vpop.permute.xlu0 %970
        %972 = vrot.lane.b32.xlu0 %v348, 28
        %v973 = vpop.permute.xlu0 %972
        %974 = vrot.lane.b32.xlu0 %v358, 28
        %v975 = vpop.permute.xlu0 %974
        %976 = vrot.lane.b32.xlu0 %v372, 28
        %v977 = vpop.permute.xlu0 %976
        %978 = vrot.lane.b32.xlu0 %v382, 28
        %v979 = vpop.permute.xlu0 %978
        %980 = vrot.lane.b32.xlu0 %v396, 28
        %v981 = vpop.permute.xlu0 %980
        %982 = vrot.lane.b32.xlu0 %v406, 28
        %v983 = vpop.permute.xlu0 %982
        %984 = vrot.lane.b32.xlu0 %v420, 28
        %v985 = vpop.permute.xlu0 %984
        %986 = vrot.lane.b32.xlu0 %v430, 28
        %v987 = vpop.permute.xlu0 %986
        %988 = vrot.lane.b32.xlu0 %v724, 28
        %v989 = vpop.permute.xlu0 %988
        %990 = vrot.lane.b32.xlu0 %v734, 28
        %v991 = vpop.permute.xlu0 %990
        %992 = vrot.lane.b32.xlu0 %v953, 28
        %v993 = vpop.permute.xlu0 %992
        %994 = vrot.lane.b32.xlu0 %v963, 28
        %v995 = vpop.permute.xlu0 %994
        %vm1012 = vcmask 257248
        %1013 = vst.msk [vmem:[#allocation2] sm:$0xf] %vm1012, %v965
        %1014 = vst.msk [vmem:[#allocation2 + $0x4] sm:$0xf] %vm1012, %v967
        %1015 = vst.msk [vmem:[#allocation2 + $0x8] sm:$0xf] %vm1012, %v969
        %1016 = vst.msk [vmem:[#allocation2 + $0xc] sm:$0xf] %vm1012, %v971
        %1017 = vst.msk [vmem:[#allocation2 + $0x10] sm:$0xf] %vm1012, %v973
        %1018 = vst.msk [vmem:[#allocation2 + $0x14] sm:$0xf] %vm1012, %v975
        %1019 = vst.msk [vmem:[#allocation2 + $0x18] sm:$0xf] %vm1012, %v977
        %1020 = vst.msk [vmem:[#allocation2 + $0x1c] sm:$0xf] %vm1012, %v979
        %1021 = vst.msk [vmem:[#allocation2 + $0x20] sm:$0xf] %vm1012, %v981
        %1022 = vst.msk [vmem:[#allocation2 + $0x24] sm:$0xf] %vm1012, %v983
        %1023 = vst.msk [vmem:[#allocation2 + $0x28] sm:$0xf] %vm1012, %v985
        %1024 = vst.msk [vmem:[#allocation2 + $0x2c] sm:$0xf] %vm1012, %v987
        %1025 = vst.msk [vmem:[#allocation2 + $0x30] sm:$0xf] %vm1012, %v989
        %1026 = vst.msk [vmem:[#allocation2 + $0x34] sm:$0xf] %vm1012, %v991
        %1027 = vst.msk [vmem:[#allocation2 + $0x38] sm:$0xf] %vm1012, %v993
        %1028 = vst.msk [vmem:[#allocation2 + $0x3c] sm:$0xf] %vm1012, %v995
        %v1030 = vrot.slane %v216, 5
        %v1031 = vrot.slane %v1030, 4
        %v1032 = vrot.slane %v217, 5
        %v1033 = vsel %vm522, %v1031, %v1032
        %v1034 = vrot.slane %v1032, 4
        %v1035 = vrot.slane %v218, 5
        %v1036 = vsel %vm522, %v1034, %v1035
        %1037 = vrot.lane.b32.xlu0 %v540, 32
        %v1038 = vpop.permute.xlu0 %1037
        %1039 = vrot.lane.b32.xlu0 %v543, 32
        %v1040 = vpop.permute.xlu0 %1039
        %1041 = vrot.lane.b32.xlu0 %v547, 32
        %v1042 = vpop.permute.xlu0 %1041
        %1043 = vrot.lane.b32.xlu0 %v550, 32
        %v1044 = vpop.permute.xlu0 %1043
        %1045 = vrot.lane.b32.xlu0 %v554, 32
        %v1046 = vpop.permute.xlu0 %1045
        %1047 = vrot.lane.b32.xlu0 %v557, 32
        %v1048 = vpop.permute.xlu0 %1047
        %1049 = vrot.lane.b32.xlu0 %v561, 32
        %v1050 = vpop.permute.xlu0 %1049
        %1051 = vrot.lane.b32.xlu0 %v564, 32
        %v1052 = vpop.permute.xlu0 %1051
        %1053 = vrot.lane.b32.xlu0 %v568, 32
        %v1054 = vpop.permute.xlu0 %1053
        %1055 = vrot.lane.b32.xlu0 %v571, 32
        %v1056 = vpop.permute.xlu0 %1055
        %1057 = vrot.lane.b32.xlu0 %v575, 32
        %v1058 = vpop.permute.xlu0 %1057
        %1059 = vrot.lane.b32.xlu0 %v578, 32
        %v1060 = vpop.permute.xlu0 %1059
        %1061 = vrot.lane.b32.xlu0 %v804, 32
        %v1062 = vpop.permute.xlu0 %1061
        %1063 = vrot.lane.b32.xlu0 %v807, 32
        %v1064 = vpop.permute.xlu0 %1063
        %1065 = vrot.lane.b32.xlu0 %v1033, 32
        %v1066 = vpop.permute.xlu0 %1065
        %1067 = vrot.lane.b32.xlu0 %v1036, 32
        %v1068 = vpop.permute.xlu0 %1067
        %vm1085 = vcmask 290048
        %1086 = vst.msk [vmem:[#allocation2] sm:$0xf] %vm1085, %v1038
        %1087 = vst.msk [vmem:[#allocation2 + $0x4] sm:$0xf] %vm1085, %v1040
        %1088 = vst.msk [vmem:[#allocation2 + $0x8] sm:$0xf] %vm1085, %v1042
        %1089 = vst.msk [vmem:[#allocation2 + $0xc] sm:$0xf] %vm1085, %v1044
        %1090 = vst.msk [vmem:[#allocation2 + $0x10] sm:$0xf] %vm1085, %v1046
        %1091 = vst.msk [vmem:[#allocation2 + $0x14] sm:$0xf] %vm1085, %v1048
        %1092 = vst.msk [vmem:[#allocation2 + $0x18] sm:$0xf] %vm1085, %v1050
        %1093 = vst.msk [vmem:[#allocation2 + $0x1c] sm:$0xf] %vm1085, %v1052
        %1094 = vst.msk [vmem:[#allocation2 + $0x20] sm:$0xf] %vm1085, %v1054
        %1095 = vst.msk [vmem:[#allocation2 + $0x24] sm:$0xf] %vm1085, %v1056
        %1096 = vst.msk [vmem:[#allocation2 + $0x28] sm:$0xf] %vm1085, %v1058
        %1097 = vst.msk [vmem:[#allocation2 + $0x2c] sm:$0xf] %vm1085, %v1060
        %1098 = vst.msk [vmem:[#allocation2 + $0x30] sm:$0xf] %vm1085, %v1062
        %1099 = vst.msk [vmem:[#allocation2 + $0x34] sm:$0xf] %vm1085, %v1064
        %1100 = vst.msk [vmem:[#allocation2 + $0x38] sm:$0xf] %vm1085, %v1066
        %1101 = vst.msk [vmem:[#allocation2 + $0x3c] sm:$0xf] %vm1085, %v1068
        %v1102 = vld [vmem:[#allocation2] sm:$0xf]
        %v1103 = vld [vmem:[#allocation2 + $0x4] sm:$0xf]
        %v1104 = vld [vmem:[#allocation2 + $0x8] sm:$0xf]
        %v1105 = vld [vmem:[#allocation2 + $0xc] sm:$0xf]
        %v1106 = vld [vmem:[#allocation2 + $0x10] sm:$0xf]
        %v1107 = vld [vmem:[#allocation2 + $0x14] sm:$0xf]
        %v1108 = vld [vmem:[#allocation2 + $0x18] sm:$0xf]
        %v1109 = vld [vmem:[#allocation2 + $0x1c] sm:$0xf]
        %v1110 = vld [vmem:[#allocation2 + $0x20] sm:$0xf]
        %v1111 = vld [vmem:[#allocation2 + $0x24] sm:$0xf]
        %v1112 = vld [vmem:[#allocation2 + $0x28] sm:$0xf]
        %v1113 = vld [vmem:[#allocation2 + $0x2c] sm:$0xf]
        %v1114 = vld [vmem:[#allocation2 + $0x30] sm:$0xf]
        %v1115 = vld [vmem:[#allocation2 + $0x34] sm:$0xf]
        %v1116 = vld [vmem:[#allocation2 + $0x38] sm:$0xf]
        %v1117 = vld [vmem:[#allocation2 + $0x3c] sm:$0xf]
        %v1118 = vld [vmem:[%s1] sm:$0xf]
        %v1119 = vld [vmem:[%s1 + $0x4] sm:$0xf]
        %v1120 = vld [vmem:[%s1 + $0x8] sm:$0xf]
        %v1121 = vld [vmem:[%s1 + $0xc] sm:$0xf]
        %v1122 = vld [vmem:[%s1 + $0x10] sm:$0x3]
        %v1123 = vld [vmem:[%s2] sm:$0x1]
        %v1125 = vperm.slane %v1123, 0
        %v1143 = vunpack.c.l.b16 %v1102
        %v1144 = vunpack.c.l.b16 %v1103
        %v1145 = vunpack.c.l.b16 %v1104
        %v1146 = vunpack.c.l.b16 %v1105
        %v1147 = vunpack.c.l.b16 %v1106
        %v1148 = vunpack.c.l.b16 %v1107
        %v1149 = vunpack.c.l.b16 %v1108
        %v1150 = vunpack.c.l.b16 %v1109
        %v1151 = vunpack.c.l.b16 %v1110
        %v1152 = vunpack.c.l.b16 %v1111
        %v1153 = vunpack.c.l.b16 %v1112
        %v1154 = vunpack.c.l.b16 %v1113
        %v1155 = vunpack.c.l.b16 %v1114
        %v1156 = vunpack.c.l.b16 %v1115
        %v1157 = vunpack.c.l.b16 %v1116
        %v1158 = vunpack.c.l.b16 %v1117
        %v1159 = vpack.c.b16 %v1144, %v1143
        %v1160 = vpack.c.b16 %v1146, %v1145
        %v1161 = vpack.c.b16 %v1148, %v1147
        %v1162 = vpack.c.b16 %v1150, %v1149
        %v1163 = vpack.c.b16 %v1152, %v1151
        %v1164 = vpack.c.b16 %v1154, %v1153
        %v1165 = vpack.c.b16 %v1156, %v1155
        %v1166 = vpack.c.b16 %v1158, %v1157
        %v1172 = vunpack.c.l.b16 %v1118
        %v1173 = vunpack.c.l.b16 %v1119
        %v1174 = vunpack.c.l.b16 %v1120
        %v1175 = vunpack.c.l.b16 %v1121
        %v1176 = vunpack.c.l.b16 %v1122
        %v1177 = vpack.c.b16 %v1173, %v1172
        %v1178 = vpack.c.b16 %v1175, %v1174
        %v1179 = vpack.c.b16 %v1176, %v1176
        %vm1182 = vcmask 293888
        %v1184 = vsel %vm1182, %v1159, 0
        %v1187 = vsel %vm1182, %v1160, 0
        %v1190 = vsel %vm1182, %v1161, 0
        %v1193 = vsel %vm1182, %v1162, 0
        %v1196 = vsel %vm1182, %v1163, 0
        %v1199 = vsel %vm1182, %v1164, 0
        %v1202 = vsel %vm1182, %v1165, 0
        %v1205 = vsel %vm1182, %v1166, 0
        %vm1207 = vcmask 1041408
        %v1209 = vsel %vm1207, %v1179, 0
        %1211 = vmatpush.bf16.msra.mxu0 0
        %1212 = vmatpush.bf16.msra.mxu0 0
        %1213 = vmatpush.bf16.msra.mxu0 0
        %1214 = vmatpush.bf16.msra.mxu0 0
        %1215 = vmatpush.bf16.msra.mxu0 0
        %1216 = vmatpush.bf16.msra.mxu0 %v1209
        %1217 = vmatpush.bf16.msra.mxu0 %v1178
        %1218 = vmatpush.bf16.msra.mxu0 %v1177
        %1219 = vmatmul.bf16.gmra.mxu0 %v1184
        %v1220 = vpop.f32.mrf.mxu0
        %v1221 = vadd.f32 %v1125, %v1220
        %v1222 = vpop.f32.mrf.mxu0
        %v1223 = vadd.f32 %v1125, %v1222
        %1224 = vmatmul.bf16.gmra.mxu0 %v1187
        %v1225 = vpop.f32.mrf.mxu0
        %v1226 = vadd.f32 %v1125, %v1225
        %v1227 = vpop.f32.mrf.mxu0
        %v1228 = vadd.f32 %v1125, %v1227
        %1229 = vmatmul.bf16.gmra.mxu0 %v1190
        %v1230 = vpop.f32.mrf.mxu0
        %v1231 = vadd.f32 %v1125, %v1230
        %v1232 = vpop.f32.mrf.mxu0
        %v1233 = vadd.f32 %v1125, %v1232
        %1234 = vmatmul.bf16.gmra.mxu0 %v1193
        %v1235 = vpop.f32.mrf.mxu0
        %v1236 = vadd.f32 %v1125, %v1235
        %v1237 = vpop.f32.mrf.mxu0
        %v1238 = vadd.f32 %v1125, %v1237
        %1239 = vmatmul.bf16.gmra.mxu0 %v1196
        %v1240 = vpop.f32.mrf.mxu0
        %v1241 = vadd.f32 %v1125, %v1240
        %v1242 = vpop.f32.mrf.mxu0
        %v1243 = vadd.f32 %v1125, %v1242
        %1244 = vmatmul.bf16.gmra.mxu0 %v1199
        %v1245 = vpop.f32.mrf.mxu0
        %v1246 = vadd.f32 %v1125, %v1245
        %v1247 = vpop.f32.mrf.mxu0
        %v1248 = vadd.f32 %v1125, %v1247
        %1249 = vmatmul.bf16.gmra.mxu0 %v1202
        %v1250 = vpop.f32.mrf.mxu0
        %v1251 = vadd.f32 %v1125, %v1250
        %v1252 = vpop.f32.mrf.mxu0
        %v1253 = vadd.f32 %v1125, %v1252
        %1254 = vmatmul.bf16.gmra.mxu0 %v1205
        %v1255 = vpop.f32.mrf.mxu0
        %v1256 = vadd.f32 %v1125, %v1255
        %v1257 = vpop.f32.mrf.mxu0
        %v1258 = vadd.f32 %v1125, %v1257
        %1259 = vdwg.mxu0
        %v1260 = vmax.f32 %v1221, 0.0
        %v1261 = vmax.f32 %v1223, 0.0
        %v1262 = vmax.f32 %v1226, 0.0
        %v1263 = vmax.f32 %v1228, 0.0
        %v1264 = vmax.f32 %v1231, 0.0
        %v1265 = vmax.f32 %v1233, 0.0
        %v1266 = vmax.f32 %v1236, 0.0
        %v1267 = vmax.f32 %v1238, 0.0
        %v1268 = vmax.f32 %v1241, 0.0
        %v1269 = vmax.f32 %v1243, 0.0
        %v1270 = vmax.f32 %v1246, 0.0
        %v1271 = vmax.f32 %v1248, 0.0
        %v1272 = vmax.f32 %v1251, 0.0
        %v1273 = vmax.f32 %v1253, 0.0
        %v1274 = vmax.f32 %v1256, 0.0
        %v1275 = vmax.f32 %v1258, 0.0
        %1276 = vst [vmem:[%s177] sm:$0xff] %v1260
        %1277 = vst [vmem:[%s177 + $0x8] sm:$0xff] %v1261
        %1278 = vst [vmem:[%s177 + $0x10] sm:$0xff] %v1262
        %1279 = vst [vmem:[%s177 + $0x18] sm:$0xff] %v1263
        %1280 = vst [vmem:[%s177 + $0x20] sm:$0xff] %v1264
        %1281 = vst [vmem:[%s177 + $0x28] sm:$0xff] %v1265
        %1282 = vst [vmem:[%s177 + $0x30] sm:$0xff] %v1266
        %1283 = vst [vmem:[%s177 + $0x38] sm:$0xff] %v1267
        %1284 = vst [vmem:[%s177 + $0x40] sm:$0xff] %v1268
        %1285 = vst [vmem:[%s177 + $0x48] sm:$0xff] %v1269
        %1286 = vst [vmem:[%s177 + $0x50] sm:$0xff] %v1270
        %1287 = vst [vmem:[%s177 + $0x58] sm:$0xff] %v1271
        %1288 = vst [vmem:[%s177 + $0x60] sm:$0xff] %v1272
        %1289 = vst [vmem:[%s177 + $0x68] sm:$0xff] %v1273
        %1290 = vst [vmem:[%s177 + $0x70] sm:$0xff] %v1274
        %1291 = vst [vmem:[%s177 + $0x78] sm:$0xff] %v1275
        %s1292 = sand.u32 %s107, 1
        %s1293 = scalar_lea.sflag [#allocation4], %s1292
        %s1294 = sand.u32 %s107, 1
        %s1295 = smul.addr %s1294, 128
        %s1296 = scalar_lea.vmem [#allocation3], %s1295
        // Predicated region
        $region33: #{tpu_custom_call.1} parent=31 // pred_check
          %p1297 = pneg %p117
        $region34: #{tpu_custom_call.1} parent=31 // pred_check_branch
          %1299 = sbr.rel (%p1297) target = $region36
        $region35: #{tpu_custom_call.1} parent=31 // pred_region
          %s1300 = smul.u32 16, %s22
          %1302 = vsyncadd %s1293, 0
          %s1303 = smul.addr %s21, 32
          %s1304 = sadd.s32 %s1300, %s1303
          %s1305 = smul.addr %s1304, 8
          %s1306 = scalar_lea.hbm %s3, %s1305
          %s1307 = sshll.u32 %s1296, 4
          %s1308 = int_to_ptr.vmem [resolvable:$true] %s1307
          %s1309 = sshll.u32 %s1306, 4
          %s1310 = int_to_ptr.hbm [resolvable:$true] %s1309
          %1315 = dma.vmem_to_hbm [thread:$0]  %s1308, 2048, %s1310, %s1293, 128, 128, 8
        $region36: #{tpu_custom_call.1} parent=31 // pred_fallthru
          _
      $region32: #{tpu_custom_call.1} parent=5 // pred_fallthru
        _
      %p1316 = scmp.le.s32.totalorder 2, %s12
      // Predicated region
      $region37: #{tpu_custom_call.1} parent=5 // pred_check
        %p1317 = pneg %p1316
      $region38: #{tpu_custom_call.1} parent=5 // pred_check_branch
        %1319 = sbr.rel (%p1317) target = $region40
      $region39: #{tpu_custom_call.1} parent=5 // pred_region
        %s1320 = ssub.s32 %s12, 2
        // Predicated region
        $region41: #{tpu_custom_call.1} parent=39 // pred_check
          %p1321 = pneg %p123
        $region42: #{tpu_custom_call.1} parent=39 // pred_check_branch
          %1323 = sbr.rel (%p1321) target = $region44
        $region43: #{tpu_custom_call.1} parent=39 // pred_region
          %s1324 = sand.u32 %s108, 1
          %s1325 = scalar_lea.sflag [#allocation4], %s1324
          %s1326 = sand.u32 %s108, 1
          %s1327 = smul.addr %s1326, 128
          %s1328 = scalar_lea.vmem [#allocation3], %s1327
          %1330 = dma.done %s1325, 2048
        $region44: #{tpu_custom_call.1} parent=39 // pred_fallthru
          _
      $region40: #{tpu_custom_call.1} parent=5 // pred_fallthru
        _
    $region6: #{tpu_custom_call.1} parent=1 // loop_footer
      %s16 = sadd.s32 1, %s12
    $region7: #{tpu_custom_call.1} parent=1 // loop_footer_branch
      %11 = sbr.rel target = $region3
    $region8: #{tpu_custom_call.1} parent=1 // loop_exit
      _
    %1331 = vsyncpa [#allocation4], 1
    %s1332 = scalar_lea.sflag [#allocation4], 1
    %1333 = vsyncpa %s1332, 1

</llo_original>
